<compile_context>
chip_gen: v6e
topology: v6e:2x2x1
jax: 0.10.0
libtpu: 0.0.40
codegen_flags: <defaults>
</compile_context>

<pallas_src>
import jax
import jax.numpy as jnp
from jax.experimental import pallas as pl
from jax.experimental.pallas import tpu as pltpu

_HIDDEN = 10
_LANES = 128
_TILE_CANDIDATES = (4096, 2048, 1024, 512, 256, 128, 64, 32, 16, 8)
_SMALL_BATCH = 1 << 14  # below this, plain XLA fusion beats kernel overhead


def regnet_kernel(params_ref, x_ref, o_ref):
    # params (SMEM, f32[31]): [w1(10) | b1(10) | w2(10) | b2(1)]
    x = x_ref[...]                                  # (tile_rows, 128), batch on lanes
    b2 = params_ref[3 * _HIDDEN]
    # Peeled first hidden unit: writes y directly (b2 fused in), no zeros init.
    h = jnp.maximum(x * params_ref[0] + params_ref[_HIDDEN], 0.0)
    y = h * params_ref[2 * _HIDDEN] + b2
    for j in range(1, _HIDDEN):                     # static unroll -> pure VPU
        h = jnp.maximum(x * params_ref[j] + params_ref[_HIDDEN + j], 0.0)
        y = y + h * params_ref[2 * _HIDDEN + j]
    o_ref[...] = y.astype(o_ref.dtype)


def _choose_tile_rows(rows_needed):
    """Pick tile_rows (multiple of 8) given rows_needed 128-lane rows.

    Goals: >= 2 grid steps (even preferred) for v7x megacore, tiles as large
    as possible to amortize per-step overhead, padding waste <= ~12.5%.
    """
    if rows_needed <= 8:
        return 8
    if rows_needed >= 16:
        cap = min(4096, max(8, (rows_needed // 2) // 8 * 8))
    else:
        cap = 8
    candidates = [t for t in _TILE_CANDIDATES if t <= cap]

    def waste_ok(tr):
        padded = pl.cdiv(rows_needed, tr) * tr
        return padded - rows_needed <= rows_needed // 8

    best = None
    for tr in candidates:
        if waste_ok(tr):
            best = tr
            break
    if best is None:
        # No tile meets the waste bound; minimum-size tiles minimize padding.
        return candidates[-1]
    # Prefer an even grid (balanced v7x megacore split) if it costs at most
    # a 2x smaller tile.
    for tr in candidates:
        if tr * 2 < best:
            break
        if waste_ok(tr) and (pl.cdiv(rows_needed, tr) % 2 == 0):
            return tr
    return best


def regnet_forward(x, w1, b1, w2, b2, *, force_kernel=False):
    """x: [B,1] f32. w1: [10,1], b1: [10], w2: [1,10], b2: [1] (PyTorch layouts)."""
    B = x.shape[0]
    if B == 0:
        return jnp.zeros((0, 1), x.dtype)

    if B < _SMALL_BATCH and not force_kernel:
        # Small-batch fast path: pad/reshape + pallas_call fixed overhead would
        # dominate; plain XLA fusion is faster here.
        xf = x.astype(jnp.float32)
        out = jnp.maximum(xf @ w1.T.astype(jnp.float32) + b1, 0.0) @ w2.T + b2
        return out.astype(x.dtype)

    rows_needed = pl.cdiv(B, _LANES)
    tile_rows = _choose_tile_rows(rows_needed)
    rows = pl.cdiv(rows_needed, tile_rows) * tile_rows
    Bp = rows * _LANES

    # Lane-dense 2-D view of the batch; pad only when actually required.
    xf = x.reshape(-1).astype(jnp.float32)
    if Bp != B:
        xf = jnp.pad(xf, (0, Bp - B))
    x2d = xf.reshape(rows, _LANES)

    # Pack all 31 parameters into one SMEM-resident f32 vector.
    params = jnp.concatenate(
        [w1.reshape(-1), b1.reshape(-1), w2.reshape(-1), b2.reshape(-1)]
    ).astype(jnp.float32)

    grid = (rows // tile_rows,)

    # ~51 VPU flops and 8 bytes (f32 in + f32 out) per element, no transcendentals.
    cost = pl.CostEstimate(
        flops=51 * Bp, bytes_accessed=8 * Bp, transcendentals=0
    )

    out2d = pl.pallas_call(
        regnet_kernel,
        out_shape=jax.ShapeDtypeStruct((rows, _LANES), jnp.float32),
        grid=grid,
        in_specs=[
            pl.BlockSpec(memory_space=pltpu.MemorySpace.SMEM),       # params (resident)
            pl.BlockSpec((tile_rows, _LANES), lambda i: (i, 0)),     # x tile
        ],
        out_specs=pl.BlockSpec((tile_rows, _LANES), lambda i: (i, 0)),
        compiler_params=pltpu.CompilerParams(
            dimension_semantics=("parallel",),
        ),
        cost_estimate=cost,
    )(params, x2d)

    out_flat = out2d.reshape(Bp)
    if Bp != B:
        out_flat = out_flat[:B]
    return out_flat.reshape(B, 1).astype(x.dtype)


def init_params(key):
    """Deterministic init mimicking PyTorch nn.Linear defaults (U[-1/sqrt(fan_in), +])."""
    k1, k2, k3, k4 = jax.random.split(key, 4)
    bound1 = 1.0 / jnp.sqrt(1.0)    # fc1: fan_in = 1
    bound2 = 1.0 / jnp.sqrt(10.0)   # fc2: fan_in = 10
    w1 = jax.random.uniform(k1, (10, 1), jnp.float32, -bound1, bound1)
    b1 = jax.random.uniform(k2, (10,), jnp.float32, -bound1, bound1)
    w2 = jax.random.uniform(k3, (1, 10), jnp.float32, -bound2, bound2)
    b2 = jax.random.uniform(k4, (1,), jnp.float32, -bound2, bound2)
    return w1, b1, w2, b2


if __name__ == "__main__":
    key = jax.random.PRNGKey(0)
    k_params, k_x1, k_x2 = jax.random.split(key, 3)
    w1, b1, w2, b2 = init_params(k_params)

    def ref_forward(xi):
        return jnp.maximum(xi @ w1.T + b1, 0.0) @ w2.T + b2

    # 1) Small batch (module-scale demo), forced through the Pallas kernel.
    x_small = jax.random.normal(k_x1, (8, 1), jnp.float32)
    out_small = jax.block_until_ready(
        regnet_forward(x_small, w1, b1, w2, b2, force_kernel=True)
    )
    assert out_small.shape == (8, 1)
    assert jnp.allclose(out_small, ref_forward(x_small), atol=1e-5, rtol=1e-5)

    # 2) Larger, non-aligned batch: exercises multi-step grid, even-grid tile
    #    selection, and the bounded-padding path.
    x_big = jax.random.normal(k_x2, (40000, 1), jnp.float32)
    out_big = jax.block_until_ready(regnet_forward(x_big, w1, b1, w2, b2))
    assert out_big.shape == (40000, 1)
    assert jnp.allclose(out_big, ref_forward(x_big), atol=1e-5, rtol=1e-5)

    print("KERNEL_OK")
</pallas_src>

<mosaic_0001>
module attributes {stable_mosaic.version = 11 : i64} {
  func.func @regnet_kernel(%arg0: i32, %arg1: memref<31xf32, #tpu.memory_space<smem>>, %arg2: memref<8x128xf32, #tpu.memory_space<vmem>>, %arg3: memref<8x128xf32, #tpu.memory_space<vmem>>) attributes {dimension_semantics = [#tpu.dimension_semantics<parallel>], iteration_bounds = array<i64: 1>, scalar_prefetch = 0 : i64, scratch_operands = 0 : i64, tpu.core_type = #tpu.core_type<tc>, window_params = [{transform_indices = @transform_0, window_bounds = array<i64: 31>}, {transform_indices = @transform_1, window_bounds = array<i64: 8, 128>}, {transform_indices = @transform_2, window_bounds = array<i64: 8, 128>}]} {
    %c0 = arith.constant 0 : index
    %c0_0 = arith.constant 0 : index
    %0 = vector.load %arg2[%c0, %c0_0] : memref<8x128xf32, #tpu.memory_space<vmem>>, vector<8x128xf32>
    %c30 = arith.constant 30 : index
    %1 = memref.load %arg1[%c30] : memref<31xf32, #tpu.memory_space<smem>>
    %c0_1 = arith.constant 0 : index
    %2 = memref.load %arg1[%c0_1] : memref<31xf32, #tpu.memory_space<smem>>
    %3 = vector.broadcast %2 : f32 to vector<8x128xf32>
    %4 = arith.mulf %0, %3 : vector<8x128xf32>
    %c10 = arith.constant 10 : index
    %5 = memref.load %arg1[%c10] : memref<31xf32, #tpu.memory_space<smem>>
    %6 = vector.broadcast %5 : f32 to vector<8x128xf32>
    %7 = arith.addf %4, %6 : vector<8x128xf32>
    %cst = arith.constant 0.000000e+00 : f32
    %8 = vector.broadcast %cst : f32 to vector<8x128xf32>
    %9 = arith.maximumf %7, %8 : vector<8x128xf32>
    %c20 = arith.constant 20 : index
    %10 = memref.load %arg1[%c20] : memref<31xf32, #tpu.memory_space<smem>>
    %11 = vector.broadcast %10 : f32 to vector<8x128xf32>
    %12 = arith.mulf %9, %11 : vector<8x128xf32>
    %13 = vector.broadcast %1 : f32 to vector<8x128xf32>
    %14 = arith.addf %12, %13 : vector<8x128xf32>
    %c1 = arith.constant 1 : index
    %15 = memref.load %arg1[%c1] : memref<31xf32, #tpu.memory_space<smem>>
    %16 = vector.broadcast %15 : f32 to vector<8x128xf32>
    %17 = arith.mulf %0, %16 : vector<8x128xf32>
    %c11 = arith.constant 11 : index
    %18 = memref.load %arg1[%c11] : memref<31xf32, #tpu.memory_space<smem>>
    %19 = vector.broadcast %18 : f32 to vector<8x128xf32>
    %20 = arith.addf %17, %19 : vector<8x128xf32>
    %cst_2 = arith.constant 0.000000e+00 : f32
    %21 = vector.broadcast %cst_2 : f32 to vector<8x128xf32>
    %22 = arith.maximumf %20, %21 : vector<8x128xf32>
    %c21 = arith.constant 21 : index
    %23 = memref.load %arg1[%c21] : memref<31xf32, #tpu.memory_space<smem>>
    %24 = vector.broadcast %23 : f32 to vector<8x128xf32>
    %25 = arith.mulf %22, %24 : vector<8x128xf32>
    %26 = arith.addf %14, %25 : vector<8x128xf32>
    %c2 = arith.constant 2 : index
    %27 = memref.load %arg1[%c2] : memref<31xf32, #tpu.memory_space<smem>>
    %28 = vector.broadcast %27 : f32 to vector<8x128xf32>
    %29 = arith.mulf %0, %28 : vector<8x128xf32>
    %c12 = arith.constant 12 : index
    %30 = memref.load %arg1[%c12] : memref<31xf32, #tpu.memory_space<smem>>
    %31 = vector.broadcast %30 : f32 to vector<8x128xf32>
    %32 = arith.addf %29, %31 : vector<8x128xf32>
    %cst_3 = arith.constant 0.000000e+00 : f32
    %33 = vector.broadcast %cst_3 : f32 to vector<8x128xf32>
    %34 = arith.maximumf %32, %33 : vector<8x128xf32>
    %c22 = arith.constant 22 : index
    %35 = memref.load %arg1[%c22] : memref<31xf32, #tpu.memory_space<smem>>
    %36 = vector.broadcast %35 : f32 to vector<8x128xf32>
    %37 = arith.mulf %34, %36 : vector<8x128xf32>
    %38 = arith.addf %26, %37 : vector<8x128xf32>
    %c3 = arith.constant 3 : index
    %39 = memref.load %arg1[%c3] : memref<31xf32, #tpu.memory_space<smem>>
    %40 = vector.broadcast %39 : f32 to vector<8x128xf32>
    %41 = arith.mulf %0, %40 : vector<8x128xf32>
    %c13 = arith.constant 13 : index
    %42 = memref.load %arg1[%c13] : memref<31xf32, #tpu.memory_space<smem>>
    %43 = vector.broadcast %42 : f32 to vector<8x128xf32>
    %44 = arith.addf %41, %43 : vector<8x128xf32>
    %cst_4 = arith.constant 0.000000e+00 : f32
    %45 = vector.broadcast %cst_4 : f32 to vector<8x128xf32>
    %46 = arith.maximumf %44, %45 : vector<8x128xf32>
    %c23 = arith.constant 23 : index
    %47 = memref.load %arg1[%c23] : memref<31xf32, #tpu.memory_space<smem>>
    %48 = vector.broadcast %47 : f32 to vector<8x128xf32>
    %49 = arith.mulf %46, %48 : vector<8x128xf32>
    %50 = arith.addf %38, %49 : vector<8x128xf32>
    %c4 = arith.constant 4 : index
    %51 = memref.load %arg1[%c4] : memref<31xf32, #tpu.memory_space<smem>>
    %52 = vector.broadcast %51 : f32 to vector<8x128xf32>
    %53 = arith.mulf %0, %52 : vector<8x128xf32>
    %c14 = arith.constant 14 : index
    %54 = memref.load %arg1[%c14] : memref<31xf32, #tpu.memory_space<smem>>
    %55 = vector.broadcast %54 : f32 to vector<8x128xf32>
    %56 = arith.addf %53, %55 : vector<8x128xf32>
    %cst_5 = arith.constant 0.000000e+00 : f32
    %57 = vector.broadcast %cst_5 : f32 to vector<8x128xf32>
    %58 = arith.maximumf %56, %57 : vector<8x128xf32>
    %c24 = arith.constant 24 : index
    %59 = memref.load %arg1[%c24] : memref<31xf32, #tpu.memory_space<smem>>
    %60 = vector.broadcast %59 : f32 to vector<8x128xf32>
    %61 = arith.mulf %58, %60 : vector<8x128xf32>
    %62 = arith.addf %50, %61 : vector<8x128xf32>
    %c5 = arith.constant 5 : index
    %63 = memref.load %arg1[%c5] : memref<31xf32, #tpu.memory_space<smem>>
    %64 = vector.broadcast %63 : f32 to vector<8x128xf32>
    %65 = arith.mulf %0, %64 : vector<8x128xf32>
    %c15 = arith.constant 15 : index
    %66 = memref.load %arg1[%c15] : memref<31xf32, #tpu.memory_space<smem>>
    %67 = vector.broadcast %66 : f32 to vector<8x128xf32>
    %68 = arith.addf %65, %67 : vector<8x128xf32>
    %cst_6 = arith.constant 0.000000e+00 : f32
    %69 = vector.broadcast %cst_6 : f32 to vector<8x128xf32>
    %70 = arith.maximumf %68, %69 : vector<8x128xf32>
    %c25 = arith.constant 25 : index
    %71 = memref.load %arg1[%c25] : memref<31xf32, #tpu.memory_space<smem>>
    %72 = vector.broadcast %71 : f32 to vector<8x128xf32>
    %73 = arith.mulf %70, %72 : vector<8x128xf32>
    %74 = arith.addf %62, %73 : vector<8x128xf32>
    %c6 = arith.constant 6 : index
    %75 = memref.load %arg1[%c6] : memref<31xf32, #tpu.memory_space<smem>>
    %76 = vector.broadcast %75 : f32 to vector<8x128xf32>
    %77 = arith.mulf %0, %76 : vector<8x128xf32>
    %c16 = arith.constant 16 : index
    %78 = memref.load %arg1[%c16] : memref<31xf32, #tpu.memory_space<smem>>
    %79 = vector.broadcast %78 : f32 to vector<8x128xf32>
    %80 = arith.addf %77, %79 : vector<8x128xf32>
    %cst_7 = arith.constant 0.000000e+00 : f32
    %81 = vector.broadcast %cst_7 : f32 to vector<8x128xf32>
    %82 = arith.maximumf %80, %81 : vector<8x128xf32>
    %c26 = arith.constant 26 : index
    %83 = memref.load %arg1[%c26] : memref<31xf32, #tpu.memory_space<smem>>
    %84 = vector.broadcast %83 : f32 to vector<8x128xf32>
    %85 = arith.mulf %82, %84 : vector<8x128xf32>
    %86 = arith.addf %74, %85 : vector<8x128xf32>
    %c7 = arith.constant 7 : index
    %87 = memref.load %arg1[%c7] : memref<31xf32, #tpu.memory_space<smem>>
    %88 = vector.broadcast %87 : f32 to vector<8x128xf32>
    %89 = arith.mulf %0, %88 : vector<8x128xf32>
    %c17 = arith.constant 17 : index
    %90 = memref.load %arg1[%c17] : memref<31xf32, #tpu.memory_space<smem>>
    %91 = vector.broadcast %90 : f32 to vector<8x128xf32>
    %92 = arith.addf %89, %91 : vector<8x128xf32>
    %cst_8 = arith.constant 0.000000e+00 : f32
    %93 = vector.broadcast %cst_8 : f32 to vector<8x128xf32>
    %94 = arith.maximumf %92, %93 : vector<8x128xf32>
    %c27 = arith.constant 27 : index
    %95 = memref.load %arg1[%c27] : memref<31xf32, #tpu.memory_space<smem>>
    %96 = vector.broadcast %95 : f32 to vector<8x128xf32>
    %97 = arith.mulf %94, %96 : vector<8x128xf32>
    %98 = arith.addf %86, %97 : vector<8x128xf32>
    %c8 = arith.constant 8 : index
    %99 = memref.load %arg1[%c8] : memref<31xf32, #tpu.memory_space<smem>>
    %100 = vector.broadcast %99 : f32 to vector<8x128xf32>
    %101 = arith.mulf %0, %100 : vector<8x128xf32>
    %c18 = arith.constant 18 : index
    %102 = memref.load %arg1[%c18] : memref<31xf32, #tpu.memory_space<smem>>
    %103 = vector.broadcast %102 : f32 to vector<8x128xf32>
    %104 = arith.addf %101, %103 : vector<8x128xf32>
    %cst_9 = arith.constant 0.000000e+00 : f32
    %105 = vector.broadcast %cst_9 : f32 to vector<8x128xf32>
    %106 = arith.maximumf %104, %105 : vector<8x128xf32>
    %c28 = arith.constant 28 : index
    %107 = memref.load %arg1[%c28] : memref<31xf32, #tpu.memory_space<smem>>
    %108 = vector.broadcast %107 : f32 to vector<8x128xf32>
    %109 = arith.mulf %106, %108 : vector<8x128xf32>
    %110 = arith.addf %98, %109 : vector<8x128xf32>
    %c9 = arith.constant 9 : index
    %111 = memref.load %arg1[%c9] : memref<31xf32, #tpu.memory_space<smem>>
    %112 = vector.broadcast %111 : f32 to vector<8x128xf32>
    %113 = arith.mulf %0, %112 : vector<8x128xf32>
    %c19 = arith.constant 19 : index
    %114 = memref.load %arg1[%c19] : memref<31xf32, #tpu.memory_space<smem>>
    %115 = vector.broadcast %114 : f32 to vector<8x128xf32>
    %116 = arith.addf %113, %115 : vector<8x128xf32>
    %cst_10 = arith.constant 0.000000e+00 : f32
    %117 = vector.broadcast %cst_10 : f32 to vector<8x128xf32>
    %118 = arith.maximumf %116, %117 : vector<8x128xf32>
    %c29 = arith.constant 29 : index
    %119 = memref.load %arg1[%c29] : memref<31xf32, #tpu.memory_space<smem>>
    %120 = vector.broadcast %119 : f32 to vector<8x128xf32>
    %121 = arith.mulf %118, %120 : vector<8x128xf32>
    %122 = arith.addf %110, %121 : vector<8x128xf32>
    %c0_11 = arith.constant 0 : index
    %c0_12 = arith.constant 0 : index
    %123 = vector.load %arg3[%c0_11, %c0_12] : memref<8x128xf32, #tpu.memory_space<vmem>>, vector<8x128xf32>
    tpu.vector_store %arg3[%c0_11, %c0_12], %122 {strides = array<i32>} : memref<8x128xf32, #tpu.memory_space<vmem>>, vector<8x128xf32>,
    return
  }
  func.func @transform_0(%arg0: i32) -> i32 {
    %c0_i32 = arith.constant 0 : i32
    %c0_i32_0 = arith.constant 0 : i32
    return %c0_i32 : i32
  }
  func.func @transform_1(%arg0: i32) -> (i32, i32) {
    %c0_i32 = arith.constant 0 : i32
    %c0_i32_0 = arith.constant 0 : i32
    return %arg0, %c0_i32 : i32, i32
  }
  func.func @transform_2(%arg0: i32) -> (i32, i32) {
    %c0_i32 = arith.constant 0 : i32
    %c0_i32_0 = arith.constant 0 : i32
    return %arg0, %c0_i32 : i32, i32
  }
}

</mosaic_0001>

<llo_original>
// kernel: tpu_custom_call.1
$region0: #{tpu_custom_call.1}
  #allocation0 [shape = 'u32[]', space=smem, size = 0x4, offset = 0x4, fixed_abs, tag = 'smem constant byte address 0x4 - core index']
  #allocation1 [shape = 'u32[144,128]{1,0:T(1,128)}', space=vmem, size = 0x12000, scoped, tag = 'internal scratch']
  %s0 = inlined_call_operand.hbm [shape: f32[31], index: 0, kind: input, shape index: {}]
  %s1 = inlined_call_operand.hbm [shape: f32[8,128], index: 1, kind: input, shape index: {}]
  %s2 = inlined_call_operand.hbm [shape: f32[8,128], index: 2, kind: output, shape index: {}]
  %s3 = sld [smem:[#allocation0]]
  $region26: #{tpu_custom_call.1} parent=0
    _
  %s5 = ssub.s32 1, %s3
  %s6 = scalar_select 0, %s5, %s3
  $region1: #{tpu_custom_call.1} parent=0
    #allocation2 [shape = 'u8[512]{0}', space=smem, size = 0x200, scoped, tag = 'input window, operand 0, single buffered']
    #allocation3 [shape = 's32[1]{0}', space=sflag, size = 0x4, scoped, tag = 'scoped memory for tpu_custom_call.1']
    #allocation4 [shape = 's32[1]{0}', space=sflag, size = 0x4, scoped, tag = 'scoped memory for tpu_custom_call.1']
    #allocation5 [shape = 's32[1]{0}', space=sflag, size = 0x4, scoped, tag = 'scoped memory for tpu_custom_call.1']
    #allocation6 [shape = 'u8[4096]{0}', space=vmem, size = 0x1000, scoped, tag = 'input window, operand 1, single buffered']
    #allocation7 [shape = 'u8[4096]{0}', space=vmem, size = 0x1000, scoped, tag = 'output window, operand 0, single buffered']
    %7 = vsyncpa [#allocation5], 0
    %8 = vsyncpa [#allocation3], 0
    %9 = vsyncpa [#allocation4], 0
    // Predicated region
    $region2: #{tpu_custom_call.1} parent=1 // pred_check
      _
    $region3: #{tpu_custom_call.1} parent=1 // pred_check_branch
      %11 = sbr.rel (0) target = $region5
    $region4: #{tpu_custom_call.1} parent=1 // pred_region
      %s13 = ssub.s32 16, 16
      %14 = vsyncadd [#allocation5], %s13
      %17 = dma.hbm_to_smem %s0, 16, [#allocation2], [#allocation5]
    $region5: #{tpu_custom_call.1} parent=1 // pred_fallthru
      _
    // Predicated region
    $region6: #{tpu_custom_call.1} parent=1 // pred_check
      _
    $region7: #{tpu_custom_call.1} parent=1 // pred_check_branch
      %19 = sbr.rel (0) target = $region9
    $region8: #{tpu_custom_call.1} parent=1 // pred_region
      %s21 = ssub.s32 128, 128
      %22 = vsyncadd [#allocation3], %s21
      %s24 = sshll.u32 [#allocation6], 4
      %s25 = int_to_ptr.vmem [resolvable:$true] %s24
      %27 = dma.hbm_to_vmem [thread:$0]  %s1, 128, %s25, [#allocation3]
    $region9: #{tpu_custom_call.1} parent=1 // pred_fallthru
      _
    // Predicated region
    $region10: #{tpu_custom_call.1} parent=1 // pred_check
      _
    $region11: #{tpu_custom_call.1} parent=1 // pred_check_branch
      %29 = sbr.rel (0) target = $region13
    $region12: #{tpu_custom_call.1} parent=1 // pred_region
      %30 = dma.done [#allocation5], 16
    $region13: #{tpu_custom_call.1} parent=1 // pred_fallthru
      _
    // Predicated region
    $region14: #{tpu_custom_call.1} parent=1 // pred_check
      _
    $region15: #{tpu_custom_call.1} parent=1 // pred_check_branch
      %32 = sbr.rel (0) target = $region17
    $region16: #{tpu_custom_call.1} parent=1 // pred_region
      %33 = dma.done [#allocation3], 128
    $region17: #{tpu_custom_call.1} parent=1 // pred_fallthru
      _
    %34 = sfence
    %v35 = vld [vmem:[#allocation6] sm:$0xff]
    %s36 = sld [smem:[#allocation2 + $0x1e]]
    %s37 = sld [smem:[#allocation2]]
    %v38 = vstv %s37
    %v39 = vmul.f32 %v35, %v38
    %s40 = sld [smem:[#allocation2 + $0xa]]
    %v41 = vstv %s40
    %v42 = vadd.f32 %v39, %v41
    %v43 = vmax.f32 %v42, 0.0
    %s44 = sld [smem:[#allocation2 + $0x14]]
    %v45 = vstv %s44
    %v46 = vmul.f32 %v43, %v45
    %v47 = vstv %s36
    %v48 = vadd.f32 %v46, %v47
    %s49 = sld [smem:[#allocation2 + $0x1]]
    %v50 = vstv %s49
    %v51 = vmul.f32 %v35, %v50
    %s52 = sld [smem:[#allocation2 + $0xb]]
    %v53 = vstv %s52
    %v54 = vadd.f32 %v51, %v53
    %v55 = vmax.f32 %v54, 0.0
    %s56 = sld [smem:[#allocation2 + $0x15]]
    %v57 = vstv %s56
    %v58 = vmul.f32 %v55, %v57
    %v59 = vadd.f32 %v48, %v58
    %s60 = sld [smem:[#allocation2 + $0x2]]
    %v61 = vstv %s60
    %v62 = vmul.f32 %v35, %v61
    %s63 = sld [smem:[#allocation2 + $0xc]]
    %v64 = vstv %s63
    %v65 = vadd.f32 %v62, %v64
    %v66 = vmax.f32 %v65, 0.0
    %s67 = sld [smem:[#allocation2 + $0x16]]
    %v68 = vstv %s67
    %v69 = vmul.f32 %v66, %v68
    %v70 = vadd.f32 %v59, %v69
    %s71 = sld [smem:[#allocation2 + $0x3]]
    %v72 = vstv %s71
    %v73 = vmul.f32 %v35, %v72
    %s74 = sld [smem:[#allocation2 + $0xd]]
    %v75 = vstv %s74
    %v76 = vadd.f32 %v73, %v75
    %v77 = vmax.f32 %v76, 0.0
    %s78 = sld [smem:[#allocation2 + $0x17]]
    %v79 = vstv %s78
    %v80 = vmul.f32 %v77, %v79
    %v81 = vadd.f32 %v70, %v80
    %s82 = sld [smem:[#allocation2 + $0x4]]
    %v83 = vstv %s82
    %v84 = vmul.f32 %v35, %v83
    %s85 = sld [smem:[#allocation2 + $0xe]]
    %v86 = vstv %s85
    %v87 = vadd.f32 %v84, %v86
    %v88 = vmax.f32 %v87, 0.0
    %s89 = sld [smem:[#allocation2 + $0x18]]
    %v90 = vstv %s89
    %v91 = vmul.f32 %v88, %v90
    %v92 = vadd.f32 %v81, %v91
    %s93 = sld [smem:[#allocation2 + $0x5]]
    %v94 = vstv %s93
    %v95 = vmul.f32 %v35, %v94
    %s96 = sld [smem:[#allocation2 + $0xf]]
    %v97 = vstv %s96
    %v98 = vadd.f32 %v95, %v97
    %v99 = vmax.f32 %v98, 0.0
    %s100 = sld [smem:[#allocation2 + $0x19]]
    %v101 = vstv %s100
    %v102 = vmul.f32 %v99, %v101
    %v103 = vadd.f32 %v92, %v102
    %s104 = sld [smem:[#allocation2 + $0x6]]
    %v105 = vstv %s104
    %v106 = vmul.f32 %v35, %v105
    %s107 = sld [smem:[#allocation2 + $0x10]]
    %v108 = vstv %s107
    %v109 = vadd.f32 %v106, %v108
    %v110 = vmax.f32 %v109, 0.0
    %s111 = sld [smem:[#allocation2 + $0x1a]]
    %v112 = vstv %s111
    %v113 = vmul.f32 %v110, %v112
    %v114 = vadd.f32 %v103, %v113
    %s115 = sld [smem:[#allocation2 + $0x7]]
    %v116 = vstv %s115
    %v117 = vmul.f32 %v35, %v116
    %s118 = sld [smem:[#allocation2 + $0x11]]
    %v119 = vstv %s118
    %v120 = vadd.f32 %v117, %v119
    %v121 = vmax.f32 %v120, 0.0
    %s122 = sld [smem:[#allocation2 + $0x1b]]
    %v123 = vstv %s122
    %v124 = vmul.f32 %v121, %v123
    %v125 = vadd.f32 %v114, %v124
    %s126 = sld [smem:[#allocation2 + $0x8]]
    %v127 = vstv %s126
    %v128 = vmul.f32 %v35, %v127
    %s129 = sld [smem:[#allocation2 + $0x12]]
    %v130 = vstv %s129
    %v131 = vadd.f32 %v128, %v130
    %v132 = vmax.f32 %v131, 0.0
    %s133 = sld [smem:[#allocation2 + $0x1c]]
    %v134 = vstv %s133
    %v135 = vmul.f32 %v132, %v134
    %v136 = vadd.f32 %v125, %v135
    %s137 = sld [smem:[#allocation2 + $0x9]]
    %v138 = vstv %s137
    %v139 = vmul.f32 %v35, %v138
    %s140 = sld [smem:[#allocation2 + $0x13]]
    %v141 = vstv %s140
    %v142 = vadd.f32 %v139, %v141
    %v143 = vmax.f32 %v142, 0.0
    %s144 = sld [smem:[#allocation2 + $0x1d]]
    %v145 = vstv %s144
    %v146 = vmul.f32 %v143, %v145
    %v147 = vadd.f32 %v136, %v146
    %148 = vst [vmem:[#allocation7] sm:$0xff] %v147
    // Predicated region
    $region18: #{tpu_custom_call.1} parent=1 // pred_check
      _
    $region19: #{tpu_custom_call.1} parent=1 // pred_check_branch
      %150 = sbr.rel (0) target = $region21
    $region20: #{tpu_custom_call.1} parent=1 // pred_region
      %s152 = ssub.s32 128, 128
      %153 = vsyncadd [#allocation4], %s152
      %s155 = sshll.u32 [#allocation7], 4
      %s156 = int_to_ptr.vmem [resolvable:$true] %s155
      %158 = dma.vmem_to_hbm [thread:$0]  %s156, 128, %s2, [#allocation4]
    $region21: #{tpu_custom_call.1} parent=1 // pred_fallthru
      _
    // Predicated region
    $region22: #{tpu_custom_call.1} parent=1 // pred_check
      _
    $region23: #{tpu_custom_call.1} parent=1 // pred_check_branch
      %160 = sbr.rel (0) target = $region25
    $region24: #{tpu_custom_call.1} parent=1 // pred_region
      %161 = dma.done [#allocation4], 128
    $region25: #{tpu_custom_call.1} parent=1 // pred_fallthru
      _
    %162 = vsyncpa [#allocation3], 1
    %163 = vsyncpa [#allocation4], 1
    %164 = vsyncpa [#allocation5], 1

</llo_original>
